<compile_context>
chip_gen: v7x
topology: tpu7x:2x2x1
jax: 0.10.0
libtpu: 0.0.40
codegen_flags: <defaults>
</compile_context>

<pallas_src>
import numpy as np
import jax
import jax.numpy as jnp
from jax import lax
from jax.experimental import pallas as pl
from jax.experimental.pallas import tpu as pltpu


def _cdiv(a: int, b: int) -> int:
    return (a + b - 1) // b


def _num_tensorcores_per_device() -> int:
    """TensorCores addressable per JAX device (megacore split candidates)."""
    try:
        kind = jax.devices()[0].device_kind.lower()
    except Exception:
        return 1
    if "v4" in kind or "v5p" in kind or "v7" in kind or "7x" in kind:
        return 2
    return 1  # v5e / v6e: single TensorCore per device


def _vmem_capacity_bytes() -> int:
    """Per-core VMEM capacity; conservative (v7x) fallback if the query fails."""
    try:
        cap = getattr(pltpu.get_tpu_info(), "vmem_capacity_bytes", None)
        if cap:
            return int(cap)
    except Exception:
        pass
    return 64 << 20


def _make_position_loss_kernel(R, tv, chunk, V, T, npj):
    nchunks = tv // chunk

    def kernel(pred_ref, gt_ref, mw_ref, out_ref, face_acc, mouth_acc):
        # pred_ref, gt_ref:   [R, tv]  current lane tile (native dtype)
        # mw_ref:             [1, tv]  f32 mouth_weight * per-vertex multiplicity
        # out_ref:            [1, 8, 128] f32 per-core partials (lane0=face, lane1=mouth)
        # face_acc/mouth_acc: [R, chunk] f32 per-core running partial sums
        i = pl.program_id(0)
        j = pl.program_id(1)

        @pl.when(j == 0)
        def _init():
            face_acc[...] = jnp.zeros_like(face_acc)
            mouth_acc[...] = jnp.zeros_like(mouth_acc)

        tile_idx = i * npj + j

        @pl.when(tile_idx < T)       # clamped tail step of the shorter core: skip
        def _accumulate():
            base = tile_idx * tv
            lane = lax.broadcasted_iota(jnp.int32, (R, chunk), 1)
            f_c = jnp.zeros((R, chunk), jnp.float32)
            m_c = jnp.zeros((R, chunk), jnp.float32)
            # Register-carried partial sums over statically unrolled 128-lane
            # chunks: no per-chunk VMEM accumulator loads/stores.
            for c in range(nchunks):
                off = c * chunk
                d = (pred_ref[:, pl.ds(off, chunk)].astype(jnp.float32)
                     - gt_ref[:, pl.ds(off, chunk)].astype(jnp.float32))
                # Mask invalid lanes BEFORE squaring: a partial last block's
                # out-of-bounds contents are unspecified (could be Inf/NaN).
                d = jnp.where(base + off + lane < V, d, 0.0)
                sq = d * d
                f_c = f_c + sq
                m_c = m_c + sq * mw_ref[:, pl.ds(off, chunk)]
            face_acc[...] += f_c
            mouth_acc[...] += m_c

        @pl.when(j == pl.num_programs(1) - 1)
        def _finalize():
            face = jnp.sum(face_acc[...])        # single cross-lane reduce per core
            mouth = jnp.sum(mouth_acc[...])
            lane3 = lax.broadcasted_iota(jnp.int32, (1, 8, 128), 2)
            out_ref[...] = jnp.where(lane3 == 0, face,
                                     jnp.where(lane3 == 1, mouth, 0.0))

    return kernel


def position_loss(pred_vert_offset_batch, gt_vert_offset_batch,
                  mouth_vert_indices, mouth_vert_weight):
    """Returns (loss, face_loss, mouth_loss) as f32 scalars."""
    if pred_vert_offset_batch.ndim != 3 or gt_vert_offset_batch.ndim != 3:
        raise ValueError('Input data dimensions are not as expected.')

    B, C, V = pred_vert_offset_batch.shape
    pred = jnp.asarray(pred_vert_offset_batch)   # keep native dtype (bf16 stays bf16)
    gt = jnp.asarray(gt_vert_offset_batch)

    # [B, 3, V] -> [B*3, V]: dense sublane utilization; contiguous reshape (no copy).
    R = B * C
    pred2 = pred.reshape(R, V)
    gt2 = gt.reshape(R, V)
    itemsize = np.dtype(pred.dtype).itemsize

    # ----- generation-dependent tiling -----
    ncore = _num_tensorcores_per_device()
    vmem_cap = _vmem_capacity_bytes()
    budget = min(vmem_cap // 4, 32 << 20)        # footprint budget for one tile set

    def footprint(tv_):
        return (2 * 2 * R * tv_ * itemsize       # pred + gt blocks, double buffered
                + 2 * tv_ * 4                    # mouth-weight block, double buffered
                + 2 * R * 128 * 4)               # f32 partial-sum scratch

    if V >= 128:
        # Largest 128-multiple <= V so every block starts in bounds; <= 8192
        # lanes keeps the unrolled chunk loop <= 64 iterations.
        tv = min((V // 128) * 128, 8192)
        while tv > 512 and footprint(tv) > budget:
            tv = max(512, (tv // 2 // 128) * 128)
        chunk = 128
    else:
        tv = V                                    # single full-extent lane block
        chunk = V

    T = _cdiv(V, tv)                              # number of real lane tiles
    ncore = max(1, min(ncore, T))
    npj = _cdiv(T, ncore)

    # ----- mouth-vertex multiplicity (static config -> host numpy, zero-padded) -----
    idx = np.asarray(mouth_vert_indices).reshape(-1).astype(np.int64)
    counts = np.bincount(idx, minlength=V)[:V].astype(np.float32)
    mw_np = np.zeros((1, T * tv), np.float32)
    mw_np[0, :V] = np.float32(mouth_vert_weight) * counts
    mw = jnp.asarray(mw_np)

    vmem_limit = int(min(max(footprint(tv) + (4 << 20), 16 << 20),
                         (vmem_cap * 3) // 4))

    def tile_map(i, j):                           # clamp the shorter core's tail step
        return (0, jnp.minimum(i * npj + j, T - 1))

    cost = pl.CostEstimate(
        flops=int(6 * R * V),
        transcendentals=0,
        bytes_accessed=int(2 * R * V * itemsize + T * tv * 4 + ncore * 8 * 128 * 4))

    out = pl.pallas_call(
        _make_position_loss_kernel(R, tv, chunk, V, T, npj),
        out_shape=jax.ShapeDtypeStruct((ncore, 8, 128), jnp.float32),
        grid_spec=pltpu.PrefetchScalarGridSpec(
            num_scalar_prefetch=0,
            grid=(ncore, npj),
            in_specs=[
                pl.BlockSpec((R, tv), tile_map),
                pl.BlockSpec((R, tv), tile_map),
                pl.BlockSpec((1, tv), tile_map),
            ],
            out_specs=pl.BlockSpec((1, 8, 128), lambda i, j: (i, 0, 0)),
            scratch_shapes=[
                pltpu.VMEM((R, chunk), jnp.float32),   # face partial sums
                pltpu.VMEM((R, chunk), jnp.float32),   # mouth partial sums
            ]),
        # TODO(synk): if xprof ever shows one v7x TensorCore idle, switch axis 0
        # to pltpu.CORE_PARALLEL ("parallel" is the documented megacore path).
        compiler_params=pltpu.CompilerParams(
            dimension_semantics=("parallel", "arbitrary"),
            vmem_limit_bytes=vmem_limit),
        cost_estimate=cost,
    )(pred2, gt2, mw)

    face_loss = out[:, 0, 0].sum()
    mouth_loss = out[:, 0, 1].sum()
    loss = face_loss + mouth_loss
    return loss, face_loss, mouth_loss


def _reference(pred, gt, mouth_idx, mouth_w):
    diff = pred - gt
    face = jnp.sum(diff * diff)
    mouth = mouth_w * jnp.sum(
        (pred[:, :, mouth_idx] - gt[:, :, mouth_idx]) ** 2)
    return face + mouth, face, mouth


if __name__ == "__main__":
    key = jax.random.PRNGKey(0)
    k1, k2, k3, k4 = jax.random.split(key, 4)

    # Case 1: tiny single-tile case; [mini_batch_size, 3, num_vertex] = [2, 3, 16].
    B, C, V = 2, 3, 16
    pred = jax.random.normal(k1, (B, C, V), dtype=jnp.float32)
    gt = jax.random.normal(k2, (B, C, V), dtype=jnp.float32)
    mouth_idx = np.array([1, 3, 5, 7, 10], dtype=np.int32)
    mouth_w = 2.5
    loss, face_loss, mouth_loss = position_loss(pred, gt, mouth_idx, mouth_w)
    jax.block_until_ready((loss, face_loss, mouth_loss))
    loss_r, face_r, mouth_r = _reference(pred, gt, mouth_idx, mouth_w)
    assert np.allclose(np.asarray(face_loss), np.asarray(face_r), rtol=1e-5, atol=1e-5)
    assert np.allclose(np.asarray(mouth_loss), np.asarray(mouth_r), rtol=1e-5, atol=1e-5)
    assert np.allclose(np.asarray(loss), np.asarray(loss_r), rtol=1e-5, atol=1e-5)

    # Case 2: exercises the multi-tile path with a masked partial last block
    # (V not a multiple of the lane tile) and a duplicated mouth index.
    B, C, V = 2, 3, 300
    pred = jax.random.normal(k3, (B, C, V), dtype=jnp.float32)
    gt = jax.random.normal(k4, (B, C, V), dtype=jnp.float32)
    mouth_idx = np.array([0, 5, 5, 42, 129, 257, 299], dtype=np.int32)
    mouth_w = 1.75
    loss, face_loss, mouth_loss = position_loss(pred, gt, mouth_idx, mouth_w)
    jax.block_until_ready((loss, face_loss, mouth_loss))
    loss_r, face_r, mouth_r = _reference(pred, gt, mouth_idx, mouth_w)
    assert np.allclose(np.asarray(face_loss), np.asarray(face_r), rtol=1e-5, atol=1e-4)
    assert np.allclose(np.asarray(mouth_loss), np.asarray(mouth_r), rtol=1e-5, atol=1e-4)
    assert np.allclose(np.asarray(loss), np.asarray(loss_r), rtol=1e-5, atol=1e-4)

    print("KERNEL_OK")
</pallas_src>

<mosaic_0001>
module attributes {stable_mosaic.version = 11 : i64} {
  func.func @kernel(%arg0: i32, %arg1: i32, %arg2: memref<6x16xf32, #tpu.memory_space<vmem>>, %arg3: memref<6x16xf32, #tpu.memory_space<vmem>>, %arg4: memref<1x16xf32, #tpu.memory_space<vmem>>, %arg5: memref<1x8x128xf32, #tpu.memory_space<vmem>>, %arg6: memref<6x16xf32, #tpu.memory_space<vmem>>, %arg7: memref<6x16xf32, #tpu.memory_space<vmem>>) attributes {dimension_semantics = [#tpu.dimension_semantics<parallel>, #tpu.dimension_semantics<arbitrary>], iteration_bounds = array<i64: 1, 1>, scalar_prefetch = 0 : i64, scratch_operands = 2 : i64, tpu.core_type = #tpu.core_type<tc>, window_params = [{transform_indices = @transform_0, window_bounds = array<i64: 6, 16>}, {transform_indices = @transform_1, window_bounds = array<i64: 6, 16>}, {transform_indices = @transform_2, window_bounds = array<i64: 1, 16>}, {transform_indices = @transform_3, window_bounds = array<i64: 1, 8, 128>}]} {
    %c0_i32 = arith.constant 0 : i32
    %0 = arith.cmpi eq, %arg1, %c0_i32 : i32
    %1 = arith.extui %0 : i1 to i32
    %c0_i32_0 = arith.constant 0 : i32
    %2 = arith.cmpi ne, %1, %c0_i32_0 : i32
    scf.if %2 {
      %cst = arith.constant 0.000000e+00 : f32
      %11 = vector.broadcast %cst : f32 to vector<6x16xf32>
      %c0 = arith.constant 0 : index
      %c0_5 = arith.constant 0 : index
      %12 = vector.load %arg6[%c0, %c0_5] : memref<6x16xf32, #tpu.memory_space<vmem>>, vector<6x16xf32>
      tpu.vector_store %arg6[%c0, %c0_5], %11 {strides = array<i32>} : memref<6x16xf32, #tpu.memory_space<vmem>>, vector<6x16xf32>,
      %cst_6 = arith.constant 0.000000e+00 : f32
      %13 = vector.broadcast %cst_6 : f32 to vector<6x16xf32>
      %c0_7 = arith.constant 0 : index
      %c0_8 = arith.constant 0 : index
      %14 = vector.load %arg7[%c0_7, %c0_8] : memref<6x16xf32, #tpu.memory_space<vmem>>, vector<6x16xf32>
      tpu.vector_store %arg7[%c0_7, %c0_8], %13 {strides = array<i32>} : memref<6x16xf32, #tpu.memory_space<vmem>>, vector<6x16xf32>,
    } else {
    }
    %c1_i32 = arith.constant 1 : i32
    %3 = arith.muli %arg0, %c1_i32 : i32
    %4 = arith.addi %3, %arg1 : i32
    %c1_i32_1 = arith.constant 1 : i32
    %5 = arith.cmpi slt, %4, %c1_i32_1 : i32
    %6 = arith.extui %5 : i1 to i32
    %c0_i32_2 = arith.constant 0 : i32
    %7 = arith.cmpi ne, %6, %c0_i32_2 : i32
    scf.if %7 {
      %c16_i32 = arith.constant 16 : i32
      %11 = arith.muli %4, %c16_i32 : i32
      %12 = tpu.iota {dimensions = array<i32: 1>} : vector<6x16xi32>
      %cst = arith.constant 0.000000e+00 : f32
      %13 = vector.broadcast %cst : f32 to vector<6x16xf32>
      %cst_5 = arith.constant 0.000000e+00 : f32
      %14 = vector.broadcast %cst_5 : f32 to vector<6x16xf32>
      %c0 = arith.constant 0 : index
      %c0_6 = arith.constant 0 : index
      %15 = vector.load %arg2[%c0, %c0_6] : memref<6x16xf32, #tpu.memory_space<vmem>>, vector<6x16xf32>
      %c0_7 = arith.constant 0 : index
      %c0_8 = arith.constant 0 : index
      %16 = vector.load %arg3[%c0_7, %c0_8] : memref<6x16xf32, #tpu.memory_space<vmem>>, vector<6x16xf32>
      %17 = arith.subf %15, %16 : vector<6x16xf32>
      %c0_i32_9 = arith.constant 0 : i32
      %18 = arith.addi %11, %c0_i32_9 : i32
      %19 = vector.broadcast %18 : i32 to vector<6x16xi32>
      %20 = arith.addi %19, %12 : vector<6x16xi32>
      %c16_i32_10 = arith.constant 16 : i32
      %21 = vector.broadcast %c16_i32_10 : i32 to vector<6x16xi32>
      %22 = arith.cmpi slt, %20, %21 : vector<6x16xi32>
      %cst_11 = arith.constant 0.000000e+00 : f32
      %23 = vector.broadcast %cst_11 : f32 to vector<6x16xf32>
      %24 = arith.select %22, %17, %23 : vector<6x16xi1>, vector<6x16xf32>
      %25 = arith.mulf %24, %24 : vector<6x16xf32>
      %26 = arith.addf %13, %25 : vector<6x16xf32>
      %c0_12 = arith.constant 0 : index
      %c0_13 = arith.constant 0 : index
      %27 = vector.load %arg4[%c0_12, %c0_13] : memref<1x16xf32, #tpu.memory_space<vmem>>, vector<1x16xf32>
      %28 = vector.broadcast %27 : vector<1x16xf32> to vector<6x16xf32>
      %29 = arith.mulf %25, %28 : vector<6x16xf32>
      %30 = arith.addf %14, %29 : vector<6x16xf32>
      %c0_14 = arith.constant 0 : index
      %c0_15 = arith.constant 0 : index
      %31 = vector.load %arg6[%c0_14, %c0_15] : memref<6x16xf32, #tpu.memory_space<vmem>>, vector<6x16xf32>
      %32 = arith.addf %31, %26 : vector<6x16xf32>
      %c0_16 = arith.constant 0 : index
      %c0_17 = arith.constant 0 : index
      %33 = vector.load %arg6[%c0_16, %c0_17] : memref<6x16xf32, #tpu.memory_space<vmem>>, vector<6x16xf32>
      tpu.vector_store %arg6[%c0_16, %c0_17], %32 {strides = array<i32>} : memref<6x16xf32, #tpu.memory_space<vmem>>, vector<6x16xf32>,
      %c0_18 = arith.constant 0 : index
      %c0_19 = arith.constant 0 : index
      %34 = vector.load %arg7[%c0_18, %c0_19] : memref<6x16xf32, #tpu.memory_space<vmem>>, vector<6x16xf32>
      %35 = arith.addf %34, %30 : vector<6x16xf32>
      %c0_20 = arith.constant 0 : index
      %c0_21 = arith.constant 0 : index
      %36 = vector.load %arg7[%c0_20, %c0_21] : memref<6x16xf32, #tpu.memory_space<vmem>>, vector<6x16xf32>
      tpu.vector_store %arg7[%c0_20, %c0_21], %35 {strides = array<i32>} : memref<6x16xf32, #tpu.memory_space<vmem>>, vector<6x16xf32>,
    } else {
    }
    %c0_i32_3 = arith.constant 0 : i32
    %8 = arith.cmpi eq, %arg1, %c0_i32_3 : i32
    %9 = arith.extui %8 : i1 to i32
    %c0_i32_4 = arith.constant 0 : i32
    %10 = arith.cmpi ne, %9, %c0_i32_4 : i32
    scf.if %10 {
      %c0 = arith.constant 0 : index
      %c0_5 = arith.constant 0 : index
      %11 = vector.load %arg6[%c0, %c0_5] : memref<6x16xf32, #tpu.memory_space<vmem>>, vector<6x16xf32>
      %12 = vector.shape_cast %11 : vector<6x16xf32> to vector<1x6x16xf32>
      %cst = arith.constant dense<0.000000e+00> : vector<1xf32>
      %13 = vector.multi_reduction <add>, %12, %cst [1, 2] : vector<1x6x16xf32> to vector<1xf32>
      %14 = vector.shape_cast %13 : vector<1xf32> to vector<1x1x1xf32>
      %15 = vector.extract %14[0, 0, 0] : f32 from vector<1x1x1xf32>
      %c0_6 = arith.constant 0 : index
      %c0_7 = arith.constant 0 : index
      %16 = vector.load %arg7[%c0_6, %c0_7] : memref<6x16xf32, #tpu.memory_space<vmem>>, vector<6x16xf32>
      %17 = vector.shape_cast %16 : vector<6x16xf32> to vector<1x6x16xf32>
      %cst_8 = arith.constant dense<0.000000e+00> : vector<1xf32>
      %18 = vector.multi_reduction <add>, %17, %cst_8 [1, 2] : vector<1x6x16xf32> to vector<1xf32>
      %19 = vector.shape_cast %18 : vector<1xf32> to vector<1x1x1xf32>
      %20 = vector.extract %19[0, 0, 0] : f32 from vector<1x1x1xf32>
      %21 = tpu.iota {dimensions = array<i32: 2>} : vector<1x8x128xi32>
      %c0_i32_9 = arith.constant 0 : i32
      %22 = vector.broadcast %c0_i32_9 : i32 to vector<1x8x128xi32>
      %23 = arith.cmpi eq, %21, %22 : vector<1x8x128xi32>
      %c1_i32_10 = arith.constant 1 : i32
      %24 = vector.broadcast %c1_i32_10 : i32 to vector<1x8x128xi32>
      %25 = arith.cmpi eq, %21, %24 : vector<1x8x128xi32>
      %cst_11 = arith.constant 0.000000e+00 : f32
      %26 = vector.broadcast %20 : f32 to vector<1x8x128xf32>
      %27 = vector.broadcast %cst_11 : f32 to vector<1x8x128xf32>
      %28 = arith.select %25, %26, %27 : vector<1x8x128xi1>, vector<1x8x128xf32>
      %29 = vector.broadcast %15 : f32 to vector<1x8x128xf32>
      %30 = arith.select %23, %29, %28 : vector<1x8x128xi1>, vector<1x8x128xf32>
      %c0_12 = arith.constant 0 : index
      %c0_13 = arith.constant 0 : index
      %c0_14 = arith.constant 0 : index
      %31 = vector.load %arg5[%c0_12, %c0_13, %c0_14] : memref<1x8x128xf32, #tpu.memory_space<vmem>>, vector<1x8x128xf32>
      tpu.vector_store %arg5[%c0_12, %c0_13, %c0_14], %30 {strides = array<i32>} : memref<1x8x128xf32, #tpu.memory_space<vmem>>, vector<1x8x128xf32>,
    } else {
    }
    return
  }
  func.func @transform_0(%arg0: i32, %arg1: i32) -> (i32, i32) {
    %c1_i32 = arith.constant 1 : i32
    %0 = arith.muli %arg0, %c1_i32 : i32
    %1 = arith.addi %0, %arg1 : i32
    %c0_i32 = arith.constant 0 : i32
    %2 = arith.minsi %1, %c0_i32 : i32
    %c0_i32_0 = arith.constant 0 : i32
    %c0_i32_1 = arith.constant 0 : i32
    return %c0_i32_0, %2 : i32, i32
  }
  func.func @transform_1(%arg0: i32, %arg1: i32) -> (i32, i32) {
    %c1_i32 = arith.constant 1 : i32
    %0 = arith.muli %arg0, %c1_i32 : i32
    %1 = arith.addi %0, %arg1 : i32
    %c0_i32 = arith.constant 0 : i32
    %2 = arith.minsi %1, %c0_i32 : i32
    %c0_i32_0 = arith.constant 0 : i32
    %c0_i32_1 = arith.constant 0 : i32
    return %c0_i32_0, %2 : i32, i32
  }
  func.func @transform_2(%arg0: i32, %arg1: i32) -> (i32, i32) {
    %c1_i32 = arith.constant 1 : i32
    %0 = arith.muli %arg0, %c1_i32 : i32
    %1 = arith.addi %0, %arg1 : i32
    %c0_i32 = arith.constant 0 : i32
    %2 = arith.minsi %1, %c0_i32 : i32
    %c0_i32_0 = arith.constant 0 : i32
    %c0_i32_1 = arith.constant 0 : i32
    return %c0_i32_0, %2 : i32, i32
  }
  func.func @transform_3(%arg0: i32, %arg1: i32) -> (i32, i32, i32) {
    %c0_i32 = arith.constant 0 : i32
    %c0_i32_0 = arith.constant 0 : i32
    %c0_i32_1 = arith.constant 0 : i32
    return %arg0, %c0_i32, %c0_i32_0 : i32, i32, i32
  }
}

</mosaic_0001>

<llo_original>
// kernel: tpu_custom_call.1
$region0: #{tpu_custom_call.1}
  #allocation0 [shape = 'u32[]', space=smem, size = 0x4, offset = 0x4, fixed_abs, tag = 'smem constant byte address 0x4 - core index']
  #allocation1 [shape = 'u32[144,128]{1,0:T(1,128)}', space=vmem, size = 0x12000, scoped, tag = 'internal scratch']
  #allocation2 [shape = 'f32[6,16]{1,0:T(8,128)}', space=vmem, size = 0x1000, scoped, tag = 'scratch operand']
  #allocation3 [shape = 'f32[6,16]{1,0:T(8,128)}', space=vmem, size = 0x1000, scoped, tag = 'scratch operand']
  %s0 = inlined_call_operand.hbm [shape: f32[6,16], index: 0, kind: input, shape index: {}]
  %s1 = inlined_call_operand.hbm [shape: f32[6,16], index: 1, kind: input, shape index: {}]
  %s2 = inlined_call_operand.vmem [shape: f32[1,16], index: 2, kind: input, shape index: {}]
  %s3 = inlined_call_operand.hbm [shape: f32[1,8,128], index: 3, kind: output, shape index: {}]
  %s4 = sld [smem:[#allocation0]]
  $region42: #{tpu_custom_call.1} parent=0
    _
  %s6 = ssub.s32 1, %s4
  %s7 = scalar_select 0, %s6, %s4
  $region1: #{tpu_custom_call.1} parent=0
    #allocation4 [shape = 'u8[4096]{0}', space=vmem, size = 0x1000, scoped, tag = 'input window, operand 0, single buffered']
    #allocation5 [shape = 's32[1]{0}', space=sflag, size = 0x4, scoped, tag = 'scoped memory for tpu_custom_call.1']
    #allocation6 [shape = 's32[1]{0}', space=sflag, size = 0x4, scoped, tag = 'scoped memory for tpu_custom_call.1']
    #allocation7 [shape = 'u8[4096]{0}', space=vmem, size = 0x1000, scoped, tag = 'input window, operand 1, single buffered']
    #allocation8 [shape = 's32[1]{0}', space=sflag, size = 0x4, scoped, tag = 'scoped memory for tpu_custom_call.1']
    #allocation9 [shape = 'u8[4096]{0}', space=vmem, size = 0x1000, scoped, tag = 'output window, operand 0, single buffered']
    %8 = vsyncpa [#allocation5], 0
    %9 = vsyncpa [#allocation8], 0
    %10 = vsyncpa [#allocation6], 0
    // Predicated region
    $region2: #{tpu_custom_call.1} parent=1 // pred_check
      _
    $region3: #{tpu_custom_call.1} parent=1 // pred_check_branch
      %12 = sbr.rel (0) target = $region5
    $region4: #{tpu_custom_call.1} parent=1 // pred_region
      %s13 = sadd.s32 0, 0
      %p14 = scmp.lt.s32.totalorder %s13, 0
      %s15 = scalar_select %p14, %s13, 0
      %s17 = ssub.s32 128, 128
      %18 = vsyncadd [#allocation5], %s17
      %s19 = smul.addr %s15, 128
      %s20 = scalar_lea.hbm %s0, %s19
      %s22 = sshll.u32 [#allocation4], 4
      %s23 = int_to_ptr.vmem [resolvable:$true] %s22
      %25 = dma.hbm_to_vmem [thread:$0]  %s20, 128, %s23, [#allocation5]
    $region5: #{tpu_custom_call.1} parent=1 // pred_fallthru
      _
    // Predicated region
    $region6: #{tpu_custom_call.1} parent=1 // pred_check
      _
    $region7: #{tpu_custom_call.1} parent=1 // pred_check_branch
      %27 = sbr.rel (0) target = $region9
    $region8: #{tpu_custom_call.1} parent=1 // pred_region
      %s28 = sadd.s32 0, 0
      %p29 = scmp.lt.s32.totalorder %s28, 0
      %s30 = scalar_select %p29, %s28, 0
      %s32 = ssub.s32 128, 128
      %33 = vsyncadd [#allocation8], %s32
      %s34 = smul.addr %s30, 128
      %s35 = scalar_lea.hbm %s1, %s34
      %s37 = sshll.u32 [#allocation7], 4
      %s38 = int_to_ptr.vmem [resolvable:$true] %s37
      %40 = dma.hbm_to_vmem [thread:$0]  %s35, 128, %s38, [#allocation8]
    $region9: #{tpu_custom_call.1} parent=1 // pred_fallthru
      _
    // Predicated region
    $region10: #{tpu_custom_call.1} parent=1 // pred_check
      _
    $region11: #{tpu_custom_call.1} parent=1 // pred_check_branch
      %42 = sbr.rel (0) target = $region13
    $region12: #{tpu_custom_call.1} parent=1 // pred_region
      %s43 = sadd.s32 0, 0
      %p44 = scmp.lt.s32.totalorder %s43, 0
      %s45 = scalar_select %p44, %s43, 0
      %p46 = scmp.lt.s32.totalorder %s45, 0
      %s47 = scalar_select %p46, %s45, 0
      %s48 = scalar_lea.vmem %s2, %s47
      %s49 = sadd.s32 0, 0
      %p50 = scmp.lt.s32.totalorder %s49, 0
      %s51 = scalar_select %p50, %s49, 0
    $region13: #{tpu_custom_call.1} parent=1 // pred_fallthru
      _
    // Predicated region
    $region14: #{tpu_custom_call.1} parent=1 // pred_check
      _
    $region15: #{tpu_custom_call.1} parent=1 // pred_check_branch
      %53 = sbr.rel (0) target = $region17
    $region16: #{tpu_custom_call.1} parent=1 // pred_region
      %54 = dma.done [#allocation5], 128
    $region17: #{tpu_custom_call.1} parent=1 // pred_fallthru
      _
    // Predicated region
    $region18: #{tpu_custom_call.1} parent=1 // pred_check
      _
    $region19: #{tpu_custom_call.1} parent=1 // pred_check_branch
      %56 = sbr.rel (0) target = $region21
    $region20: #{tpu_custom_call.1} parent=1 // pred_region
      %57 = dma.done [#allocation8], 128
    $region21: #{tpu_custom_call.1} parent=1 // pred_fallthru
      _
    %s58 = sadd.s32 0, 0
    %p59 = scmp.lt.s32.totalorder %s58, 0
    %s60 = scalar_select %p59, %s58, 0
    %p61 = scmp.lt.s32.totalorder %s60, 0
    %s62 = scalar_select %p61, %s60, 0
    %s63 = scalar_lea.vmem %s2, %s62
    %s64 = sadd.s32 0, 0
    %p65 = scmp.lt.s32.totalorder %s64, 0
    %s66 = scalar_select %p65, %s64, 0
    %s67 = sadd.s32 0, 0
    %p68 = scmp.lt.s32.totalorder %s67, 0
    %s69 = scalar_select %p68, %s67, 0
    %s70 = sadd.s32 0, 0
    %p71 = scmp.lt.s32.totalorder %s70, 0
    %s72 = scalar_select %p71, %s70, 0
    %p73 = scmp.lt.s32.totalorder %s72, 0
    %s74 = scalar_select %p73, %s72, 0
    %s75 = scalar_lea.vmem %s2, %s74
    %s76 = sadd.s32 0, 0
    %p77 = scmp.lt.s32.totalorder %s76, 0
    %s78 = scalar_select %p77, %s76, 0
    %p79 = scmp.eq.s32.totalorder 0, 0
    // Predicated region
    $region22: #{tpu_custom_call.1} parent=1 // pred_check
      %p80 = pneg %p79
    $region23: #{tpu_custom_call.1} parent=1 // pred_check_branch
      %82 = sbr.rel (%p80) target = $region25
    $region24: #{tpu_custom_call.1} parent=1 // pred_region
      %vm83 = vcmask 128000
      %84 = vst.msk [vmem:[#allocation2] sm:$0x3f] %vm83, 0.0
      %85 = vst.msk [vmem:[#allocation3] sm:$0x3f] %vm83, 0.0
    $region25: #{tpu_custom_call.1} parent=1 // pred_fallthru
      _
    %s86 = sadd.s32 0, 0
    %p87 = scmp.lt.s32.totalorder %s86, 1
    // Predicated region
    $region26: #{tpu_custom_call.1} parent=1 // pred_check
      %p88 = pneg %p87
    $region27: #{tpu_custom_call.1} parent=1 // pred_check_branch
      %90 = sbr.rel (%p88) target = $region29
    $region28: #{tpu_custom_call.1} parent=1 // pred_region
      %s91 = smul.u32 %s86, 16
      %v92 = vlaneseq
      %v93 = vand.u32 %v92, 127
      %v94 = vld [vmem:[#allocation4] sm:$0x3f]
      %v95 = vld [vmem:[#allocation7] sm:$0x3f]
      %v96 = vsub.f32 %v94, %v95
      %v97 = vstv %s91
      %v98 = vadd.s32 %v97, %v93
      %vm99 = vcmp.lt.s32.totalorder %v98, 16
      %v100 = vsel %vm99, %v96, 0.0
      %v101 = vmul.f32 %v100, %v100
      %v102 = vadd.f32 %v101, 0.0
      %v103 = vld [vmem:[%s75] sm:$0x1]
      %v105 = vlaneseq
      %v106 = vshrl.u32 %v105, 7
      %v107 = vsub.s32 0, %v106
      %v108 = vrot.slane %v103, %v107
      %v110 = vmul.f32 %v101, %v108
      %v111 = vadd.f32 %v110, 0.0
      %v112 = vld [vmem:[#allocation2] sm:$0x3f]
      %v113 = vadd.f32 %v112, %v102
      %vm114 = vcmask 128000
      %115 = vst.msk [vmem:[#allocation2] sm:$0x3f] %vm114, %v113
      %v116 = vld [vmem:[#allocation3] sm:$0x3f]
      %v117 = vadd.f32 %v116, %v111
      %118 = vst.msk [vmem:[#allocation3] sm:$0x3f] %vm114, %v117
    $region29: #{tpu_custom_call.1} parent=1 // pred_fallthru
      _
    // Predicated region
    $region30: #{tpu_custom_call.1} parent=1 // pred_check
      %p119 = pneg %p79
    $region31: #{tpu_custom_call.1} parent=1 // pred_check_branch
      %121 = sbr.rel (%p119) target = $region33
    $region32: #{tpu_custom_call.1} parent=1 // pred_region
      %v122 = vld [vmem:[#allocation2] sm:$0x3f]
      %vm123 = vcmask 128000
      %v124 = vsel %vm123, %v122, 0.0
      %125 = vadd.xlane.f32.xlu0 %v124
      %v126 = vpop.xlane.xlu0 %125
      %v127 = vrot.slane %v126, 4
      %v128 = vadd.f32 %v126, %v127
      %v129 = vrot.slane %v128, 2
      %v130 = vadd.f32 %v128, %v129
      %v131 = vrot.slane %v130, 1
      %v132 = vadd.f32 %v130, %v131
      %s133 = vtos %v132
      %v134 = vld [vmem:[#allocation3] sm:$0x3f]
      %v135 = vsel %vm123, %v134, 0.0
      %136 = vadd.xlane.f32.xlu0 %v135
      %v137 = vpop.xlane.xlu0 %136
      %v138 = vrot.slane %v137, 4
      %v139 = vadd.f32 %v137, %v138
      %v140 = vrot.slane %v139, 2
      %v141 = vadd.f32 %v139, %v140
      %v142 = vrot.slane %v141, 1
      %v143 = vadd.f32 %v141, %v142
      %s144 = vtos %v143
      %v145 = vlaneseq
      %v146 = vand.u32 %v145, 127
      %vm147 = vcmp.eq.s32.totalorder %v146, 0
      %vm148 = vcmp.eq.s32.totalorder %v146, 1
      %v149 = vstv %s144
      %v150 = vsel %vm148, %v149, 0.0
      %v151 = vstv %s133
      %v152 = vsel %vm147, %v151, %v150
      %153 = vst [vmem:[#allocation9] sm:$0xff] %v152
    $region33: #{tpu_custom_call.1} parent=1 // pred_fallthru
      _
    // Predicated region
    $region34: #{tpu_custom_call.1} parent=1 // pred_check
      _
    $region35: #{tpu_custom_call.1} parent=1 // pred_check_branch
      %155 = sbr.rel (0) target = $region37
    $region36: #{tpu_custom_call.1} parent=1 // pred_region
      %s157 = ssub.s32 128, 128
      %158 = vsyncadd [#allocation6], %s157
      %s160 = sshll.u32 [#allocation9], 4
      %s161 = int_to_ptr.vmem [resolvable:$true] %s160
      %163 = dma.vmem_to_hbm [thread:$0]  %s161, 128, %s3, [#allocation6]
    $region37: #{tpu_custom_call.1} parent=1 // pred_fallthru
      _
    // Predicated region
    $region38: #{tpu_custom_call.1} parent=1 // pred_check
      _
    $region39: #{tpu_custom_call.1} parent=1 // pred_check_branch
      %165 = sbr.rel (0) target = $region41
    $region40: #{tpu_custom_call.1} parent=1 // pred_region
      %166 = dma.done [#allocation6], 128
    $region41: #{tpu_custom_call.1} parent=1 // pred_fallthru
      _
    %167 = vsyncpa [#allocation5], 1
    %168 = vsyncpa [#allocation8], 1
    %169 = vsyncpa [#allocation6], 1

</llo_original>
